<compile_context>
chip_gen: v7x
topology: tpu7x:2x2x1
jax: 0.10.0
libtpu: 0.0.40
codegen_flags: <defaults>
</compile_context>

<pallas_src>
import jax
import jax.numpy as jnp
from jax.experimental import pallas as pl
from jax.experimental.pallas import tpu as pltpu

K_BITS = 4
M = 2 ** K_BITS     # 16 output classes
N_IN = 7            # input feature dim
HIDDEN = 32

LANE_GRAN = 512     # batch-tile granularity (multiple of 128 lanes)
TB_MAX = 32768      # max batch tile: ~6 MiB double-buffered VMEM (v5e-safe)
MIN_STEPS = 8       # keep >=8 grid steps for large B (v7x 2-TC sharding + overlap)


def _choose_tb(batch, tb_max=TB_MAX, min_steps=MIN_STEPS):
    """Pick a batch (lane-axis) tile: as large as possible up to tb_max while
    keeping >= min_steps grid steps for big batches; small batches get one
    minimally-padded tile."""
    b_ceil = ((batch + LANE_GRAN - 1) // LANE_GRAN) * LANE_GRAN
    tb = max(LANE_GRAN, -(-b_ceil // min_steps))            # ceil-div
    tb = ((tb + LANE_GRAN - 1) // LANE_GRAN) * LANE_GRAN    # round up to granularity
    return min(tb, tb_max)


def receiver_kernel(x_ref, w1_ref, b1_ref, w2_ref, b2_ref, o_ref):
    # Cast the streamed activations to bf16 in-kernel (VPU is idle; lets the
    # wrapper stream x in whatever float dtype the producer already has).
    x = x_ref[...].astype(jnp.bfloat16)
    # (HIDDEN, N_IN) @ (N_IN, TB) -> (HIDDEN, TB); bf16 operands, f32 MXU accum.
    h = jnp.dot(w1_ref[...], x, preferred_element_type=jnp.float32)
    h = jnp.maximum(h + b1_ref[...], 0.0)              # f32 epilogue (v5e-safe)
    # (M, HIDDEN) @ (HIDDEN, TB) -> (M, TB); second dot also native bf16 MXU.
    y = jnp.dot(w2_ref[...], h.astype(w2_ref.dtype),
                preferred_element_type=jnp.float32)
    o_ref[...] = (y + b2_ref[...]).astype(o_ref.dtype)


def _prep_params(w1, b1, w2, b2, stream_dtype):
    return (w1.astype(stream_dtype),                    # (HIDDEN, N_IN) PyTorch layout
            b1.reshape(HIDDEN, 1).astype(jnp.float32),
            w2.astype(stream_dtype),                    # (M, HIDDEN)
            b2.reshape(M, 1).astype(jnp.float32))


def _receiver_pallas(x_t, w1_s, b1_c, w2_s, b2_c, *, tb, out_dtype):
    """x_t: (N_IN, b_pad) with b_pad % tb == 0. Returns (M, b_pad) lane-dense."""
    b_pad = x_t.shape[1]
    nb = b_pad // tb
    return pl.pallas_call(
        receiver_kernel,
        out_shape=jax.ShapeDtypeStruct((M, b_pad), out_dtype),
        grid=(nb,),
        in_specs=[
            # x: streamed tile-by-tile over the batch (lane) axis.
            pl.BlockSpec((N_IN, tb), lambda i: (0, i)),
            # Weights / biases: constant block index -> resident in VMEM.
            pl.BlockSpec((HIDDEN, N_IN), lambda i: (0, 0)),
            pl.BlockSpec((HIDDEN, 1), lambda i: (0, 0)),
            pl.BlockSpec((M, HIDDEN), lambda i: (0, 0)),
            pl.BlockSpec((M, 1), lambda i: (0, 0)),
        ],
        out_specs=pl.BlockSpec((M, tb), lambda i: (0, i)),
        compiler_params=pltpu.CompilerParams(
            dimension_semantics=("parallel",)),
    )(x_t, w1_s, b1_c, w2_s, b2_c)


def receiver_forward_lane_dense(x_t, w1, b1, w2, b2, *, tb=None,
                                out_dtype=jnp.float32,
                                stream_dtype=jnp.bfloat16):
    """Fast path: no wrapper-side layout passes.

    x_t: (N_IN, B), any float dtype (f32 fine; cast to bf16 happens in-kernel)
    returns (M, B), lane-dense (batch on the last axis).
    If B is a multiple of the chosen tile, no padding / slicing copies occur.
    """
    n_in, B = x_t.shape
    assert n_in == N_IN, x_t.shape
    if tb is None:
        tb = _choose_tb(B)
    assert tb % 128 == 0, "batch tile must be a multiple of 128 lanes"
    b_pad = pl.cdiv(B, tb) * tb
    if b_pad != B:
        x_t = jnp.pad(x_t, ((0, 0), (0, b_pad - B)))
    w1_s, b1_c, w2_s, b2_c = _prep_params(w1, b1, w2, b2, stream_dtype)
    out_t = _receiver_pallas(x_t, w1_s, b1_c, w2_s, b2_c,
                             tb=tb, out_dtype=out_dtype)
    return out_t if b_pad == B else out_t[:, :B]


def receiver_forward(x, w1, b1, w2, b2, *, tb=None, out_dtype=jnp.float32,
                     stream_dtype=jnp.bfloat16):
    """PyTorch-semantics forward of `receiver`.

    x:  (B, N_IN) float32 (same layout as the PyTorch module input)
    w1: (HIDDEN, N_IN), b1: (HIDDEN,)   -- PyTorch nn.Linear layout (out, in)
    w2: (M, HIDDEN),    b2: (M,)
    returns (B, M) in out_dtype.

    NOTE: the (B,N_IN)->(N_IN,B) input relayout and the final (M,B)->(B,M)
    transpose are extra XLA passes over HBM; callers that control layouts
    should use receiver_forward_lane_dense instead.
    """
    B = x.shape[0]
    if tb is None:
        tb = _choose_tb(B)
    assert tb % 128 == 0, "batch tile must be a multiple of 128 lanes"
    b_pad = pl.cdiv(B, tb) * tb
    # Single fused pad+transpose+cast pass to the lane-dense streaming layout.
    x_t = jnp.pad(x, ((0, b_pad - B), (0, 0))).T.astype(stream_dtype)
    w1_s, b1_c, w2_s, b2_c = _prep_params(w1, b1, w2, b2, stream_dtype)
    out_t = _receiver_pallas(x_t, w1_s, b1_c, w2_s, b2_c,
                             tb=tb, out_dtype=out_dtype)
    return out_t[:, :B].T                                       # (B, M)


def init_params(key):
    """Deterministic init mirroring nn.Linear's U(-1/sqrt(fan_in), 1/sqrt(fan_in)).
    Weights kept in PyTorch layout: (out_features, in_features)."""
    k1, k2, k3, k4 = jax.random.split(key, 4)
    bound1 = 1.0 / jnp.sqrt(jnp.float32(N_IN))
    bound2 = 1.0 / jnp.sqrt(jnp.float32(HIDDEN))
    w1 = jax.random.uniform(k1, (HIDDEN, N_IN), jnp.float32, -bound1, bound1)
    b1 = jax.random.uniform(k2, (HIDDEN,), jnp.float32, -bound1, bound1)
    w2 = jax.random.uniform(k3, (M, HIDDEN), jnp.float32, -bound2, bound2)
    b2 = jax.random.uniform(k4, (M,), jnp.float32, -bound2, bound2)
    return w1, b1, w2, b2


if __name__ == "__main__":
    key = jax.random.PRNGKey(0)
    kx, kp = jax.random.split(key)

    batch = 200   # deliberately not a multiple of the tile -> exercises padding
    x = jax.random.normal(kx, (batch, N_IN), jnp.float32)
    w1, b1, w2, b2 = init_params(kp)

    # Reference in plain JAX, mirroring the kernel's bf16 streaming / f32 accum.
    st = jnp.bfloat16
    xb = x.astype(st).astype(jnp.float32)
    w1b = w1.astype(st).astype(jnp.float32)
    w2b = w2.astype(st).astype(jnp.float32)
    h_ref = jnp.maximum(xb @ w1b.T + b1, 0.0)
    ref = h_ref.astype(st).astype(jnp.float32) @ w2b.T + b2

    # 1) PyTorch-semantics path: (B, n) -> (B, M), f32 output.
    out = jax.block_until_ready(receiver_forward(x, w1, b1, w2, b2))
    assert out.shape == (batch, M), out.shape
    assert jnp.allclose(out, ref, atol=2e-3, rtol=2e-3), \
        float(jnp.max(jnp.abs(out - ref)))

    # 2) Lane-dense fast path: (n, B) -> (M, B), no wrapper layout passes.
    out_t = jax.block_until_ready(
        receiver_forward_lane_dense(x.T, w1, b1, w2, b2))
    assert out_t.shape == (M, batch), out_t.shape
    assert jnp.allclose(out_t.T, out, atol=1e-5, rtol=1e-5), \
        float(jnp.max(jnp.abs(out_t.T - out)))

    # 3) Optional bf16 output (halves the dominant HBM write stream).
    out_bf16 = jax.block_until_ready(
        receiver_forward(x, w1, b1, w2, b2, out_dtype=jnp.bfloat16))
    assert out_bf16.dtype == jnp.bfloat16
    assert jnp.allclose(out_bf16.astype(jnp.float32), ref, atol=3e-2, rtol=3e-2)

    print("KERNEL_OK")
</pallas_src>

<mosaic_0001>
module attributes {stable_mosaic.version = 11 : i64} {
  func.func @receiver_kernel(%arg0: i32, %arg1: memref<7x512xbf16, #tpu.memory_space<vmem>>, %arg2: memref<32x7xbf16, #tpu.memory_space<vmem>>, %arg3: memref<32x1xf32, #tpu.memory_space<vmem>>, %arg4: memref<16x32xbf16, #tpu.memory_space<vmem>>, %arg5: memref<16x1xf32, #tpu.memory_space<vmem>>, %arg6: memref<16x512xf32, #tpu.memory_space<vmem>>) attributes {dimension_semantics = [#tpu.dimension_semantics<parallel>], iteration_bounds = array<i64: 1>, scalar_prefetch = 0 : i64, scratch_operands = 0 : i64, tpu.core_type = #tpu.core_type<tc>, window_params = [{transform_indices = @transform_0, window_bounds = array<i64: 7, 512>}, {pipeline_mode = #tpu.pipeline_mode<synchronous>, transform_indices = @transform_1, window_bounds = array<i64: 32, 7>}, {pipeline_mode = #tpu.pipeline_mode<synchronous>, transform_indices = @transform_2, window_bounds = array<i64: 32, 1>}, {pipeline_mode = #tpu.pipeline_mode<synchronous>, transform_indices = @transform_3, window_bounds = array<i64: 16, 32>}, {pipeline_mode = #tpu.pipeline_mode<synchronous>, transform_indices = @transform_4, window_bounds = array<i64: 16, 1>}, {transform_indices = @transform_5, window_bounds = array<i64: 16, 512>}]} {
    %c0 = arith.constant 0 : index
    %c0_0 = arith.constant 0 : index
    %0 = vector.load %arg1[%c0, %c0_0] : memref<7x512xbf16, #tpu.memory_space<vmem>>, vector<7x512xbf16>
    %c0_1 = arith.constant 0 : index
    %c0_2 = arith.constant 0 : index
    %1 = vector.load %arg2[%c0_1, %c0_2] : memref<32x7xbf16, #tpu.memory_space<vmem>>, vector<32x7xbf16>
    %cst = arith.constant dense<0.000000e+00> : vector<32x512xf32>
    %2 = tpu.matmul %1, %0, %cst {dimension_numbers = #tpu.dot_dimension_numbers<[1], [0], [0], [1], [0, 0, 1, 1], [], []>} : vector<32x7xbf16>, vector<7x512xbf16>, vector<32x512xf32> -> vector<32x512xf32>
    %c0_3 = arith.constant 0 : index
    %c0_4 = arith.constant 0 : index
    %3 = vector.load %arg3[%c0_3, %c0_4] : memref<32x1xf32, #tpu.memory_space<vmem>>, vector<32x1xf32>
    %4 = vector.broadcast %3 : vector<32x1xf32> to vector<32x512xf32>
    %5 = arith.addf %2, %4 : vector<32x512xf32>
    %cst_5 = arith.constant 0.000000e+00 : f32
    %6 = vector.broadcast %cst_5 : f32 to vector<32x512xf32>
    %7 = arith.maximumf %5, %6 : vector<32x512xf32>
    %c0_6 = arith.constant 0 : index
    %c0_7 = arith.constant 0 : index
    %8 = vector.load %arg4[%c0_6, %c0_7] : memref<16x32xbf16, #tpu.memory_space<vmem>>, vector<16x32xbf16>
    %9 = arith.truncf %7 : vector<32x512xf32> to vector<32x512xbf16>
    %cst_8 = arith.constant dense<0.000000e+00> : vector<16x512xf32>
    %10 = tpu.matmul %8, %9, %cst_8 {dimension_numbers = #tpu.dot_dimension_numbers<[1], [0], [0], [1], [0, 0, 1, 1], [], []>} : vector<16x32xbf16>, vector<32x512xbf16>, vector<16x512xf32> -> vector<16x512xf32>
    %c0_9 = arith.constant 0 : index
    %c0_10 = arith.constant 0 : index
    %11 = vector.load %arg5[%c0_9, %c0_10] : memref<16x1xf32, #tpu.memory_space<vmem>>, vector<16x1xf32>
    %12 = vector.broadcast %11 : vector<16x1xf32> to vector<16x512xf32>
    %13 = arith.addf %10, %12 : vector<16x512xf32>
    %c0_11 = arith.constant 0 : index
    %c0_12 = arith.constant 0 : index
    %14 = vector.load %arg6[%c0_11, %c0_12] : memref<16x512xf32, #tpu.memory_space<vmem>>, vector<16x512xf32>
    tpu.vector_store %arg6[%c0_11, %c0_12], %13 {strides = array<i32>} : memref<16x512xf32, #tpu.memory_space<vmem>>, vector<16x512xf32>,
    return
  }
  func.func @transform_0(%arg0: i32) -> (i32, i32) {
    %c0_i32 = arith.constant 0 : i32
    %c0_i32_0 = arith.constant 0 : i32
    return %c0_i32, %arg0 : i32, i32
  }
  func.func @transform_1(%arg0: i32) -> (i32, i32) {
    %c0_i32 = arith.constant 0 : i32
    %c0_i32_0 = arith.constant 0 : i32
    %c0_i32_1 = arith.constant 0 : i32
    return %c0_i32, %c0_i32_0 : i32, i32
  }
  func.func @transform_2(%arg0: i32) -> (i32, i32) {
    %c0_i32 = arith.constant 0 : i32
    %c0_i32_0 = arith.constant 0 : i32
    %c0_i32_1 = arith.constant 0 : i32
    return %c0_i32, %c0_i32_0 : i32, i32
  }
  func.func @transform_3(%arg0: i32) -> (i32, i32) {
    %c0_i32 = arith.constant 0 : i32
    %c0_i32_0 = arith.constant 0 : i32
    %c0_i32_1 = arith.constant 0 : i32
    return %c0_i32, %c0_i32_0 : i32, i32
  }
  func.func @transform_4(%arg0: i32) -> (i32, i32) {
    %c0_i32 = arith.constant 0 : i32
    %c0_i32_0 = arith.constant 0 : i32
    %c0_i32_1 = arith.constant 0 : i32
    return %c0_i32, %c0_i32_0 : i32, i32
  }
  func.func @transform_5(%arg0: i32) -> (i32, i32) {
    %c0_i32 = arith.constant 0 : i32
    %c0_i32_0 = arith.constant 0 : i32
    return %c0_i32, %arg0 : i32, i32
  }
}

</mosaic_0001>

<llo_original>
// kernel: tpu_custom_call.1
$region0: #{tpu_custom_call.1}
  #allocation0 [shape = 'u32[]', space=smem, size = 0x4, offset = 0x4, fixed_abs, tag = 'smem constant byte address 0x4 - core index']
  #allocation1 [shape = 'u32[144,128]{1,0:T(1,128)}', space=vmem, size = 0x12000, scoped, tag = 'internal scratch']
  %s0 = inlined_call_operand.vmem [shape: bf16[7,512], index: 0, kind: input, shape index: {}]
  %s1 = inlined_call_operand.vmem [shape: bf16[32,7], index: 1, kind: input, shape index: {}]
  %s2 = inlined_call_operand.vmem [shape: f32[32,1], index: 2, kind: input, shape index: {}]
  %s3 = inlined_call_operand.vmem [shape: bf16[16,32], index: 3, kind: input, shape index: {}]
  %s4 = inlined_call_operand.vmem [shape: f32[16,1], index: 4, kind: input, shape index: {}]
  %s5 = inlined_call_operand.hbm [shape: f32[16,512], index: 5, kind: output, shape index: {}]
  %s6 = sld [smem:[#allocation0]]
  $region30: #{tpu_custom_call.1} parent=0
    _
  %s8 = ssub.s32 1, %s6
  %s9 = scalar_select 0, %s8, %s6
  $region1: #{tpu_custom_call.1} parent=0
    #allocation2 [shape = 'u8[32768]{0}', space=vmem, size = 0x8000, scoped, tag = 'output window, operand 0, single buffered']
    #allocation3 [shape = 's32[1]{0}', space=sflag, size = 0x4, scoped, tag = 'scoped memory for tpu_custom_call.1']
    %10 = vsyncpa [#allocation3], 0
    // Predicated region
    $region2: #{tpu_custom_call.1} parent=1 // pred_check
      _
    $region3: #{tpu_custom_call.1} parent=1 // pred_check_branch
      %12 = sbr.rel (0) target = $region5
    $region4: #{tpu_custom_call.1} parent=1 // pred_region
      _
    $region5: #{tpu_custom_call.1} parent=1 // pred_fallthru
      _
    // Predicated region
    $region6: #{tpu_custom_call.1} parent=1 // pred_check
      _
    $region7: #{tpu_custom_call.1} parent=1 // pred_check_branch
      %14 = sbr.rel (0) target = $region9
    $region8: #{tpu_custom_call.1} parent=1 // pred_region
      _
    $region9: #{tpu_custom_call.1} parent=1 // pred_fallthru
      _
    // Predicated region
    $region10: #{tpu_custom_call.1} parent=1 // pred_check
      _
    $region11: #{tpu_custom_call.1} parent=1 // pred_check_branch
      %16 = sbr.rel (0) target = $region13
    $region12: #{tpu_custom_call.1} parent=1 // pred_region
      _
    $region13: #{tpu_custom_call.1} parent=1 // pred_fallthru
      _
    // Predicated region
    $region14: #{tpu_custom_call.1} parent=1 // pred_check
      _
    $region15: #{tpu_custom_call.1} parent=1 // pred_check_branch
      %18 = sbr.rel (0) target = $region17
    $region16: #{tpu_custom_call.1} parent=1 // pred_region
      _
    $region17: #{tpu_custom_call.1} parent=1 // pred_fallthru
      _
    // Predicated region
    $region18: #{tpu_custom_call.1} parent=1 // pred_check
      _
    $region19: #{tpu_custom_call.1} parent=1 // pred_check_branch
      %20 = sbr.rel (0) target = $region21
    $region20: #{tpu_custom_call.1} parent=1 // pred_region
      _
    $region21: #{tpu_custom_call.1} parent=1 // pred_fallthru
      _
    %v22 = vld [vmem:[%s0] sm:$0xff]
    %v23 = vld [vmem:[%s0 + $0x8] sm:$0xff]
    %v24 = vld [vmem:[%s1] sm:$0xf]
    %v25 = vld [vmem:[%s1 + $0x4] sm:$0xf]
    %v26 = vld [vmem:[%s1 + $0x8] sm:$0xf]
    %v27 = vld [vmem:[%s1 + $0xc] sm:$0xf]
    %v28 = vld [vmem:[%s2] sm:$0xff]
    %v29 = vld [vmem:[%s2 + $0x8] sm:$0xff]
    %v30 = vld [vmem:[%s2 + $0x10] sm:$0xff]
    %v31 = vld [vmem:[%s2 + $0x18] sm:$0xff]
    %33 = vset.pattern.permute.xlu0 0
    %34 = vperm.xlu0 %33, %v28
    %v35 = vpop.permute.xlu0 %34
    %38 = vset.pattern.permute.xlu0 0
    %39 = vperm.xlu0 %38, %v29
    %v40 = vpop.permute.xlu0 %39
    %43 = vset.pattern.permute.xlu0 0
    %44 = vperm.xlu0 %43, %v30
    %v45 = vpop.permute.xlu0 %44
    %48 = vset.pattern.permute.xlu0 0
    %49 = vperm.xlu0 %48, %v31
    %v50 = vpop.permute.xlu0 %49
    %v56 = vunpack.c.l.b16 %v24
    %v57 = vunpack.c.l.b16 %v25
    %v58 = vunpack.c.l.b16 %v26
    %v59 = vunpack.c.l.b16 %v27
    %v60 = vpack.c.b16 %v57, %v56
    %v61 = vpack.c.b16 %v59, %v58
    %v64 = vunpack.c.l.b16 %v22
    %v65 = vunpack.c.h.b16 %v22
    %v66 = vunpack.c.l.b16 %v23
    %v67 = vunpack.c.h.b16 %v23
    %v68 = vpack.c.b16 %v64, %v64
    %v69 = vpack.c.b16 %v65, %v65
    %v70 = vpack.c.b16 %v66, %v66
    %v71 = vpack.c.b16 %v67, %v67
    %vm72 = vcmask 56320
    %v74 = vsel %vm72, %v60, 0
    %v77 = vsel %vm72, %v61, 0
    %vm79 = vcmask 1042432
    %vm80 = vcmask 1043456
    %v81 = vsel %vm79, 4294967295, 65535
    %v82 = vsel %vm80, %v81, 0
    %v84 = vand.u32 %v68, %v82
    %v87 = vand.u32 %v69, %v82
    %v90 = vand.u32 %v70, %v82
    %v93 = vand.u32 %v71, %v82
    %95 = vmatprep.subr.bf16.mxu0 %v87
    %96 = vmatpush1.bf16.msra.mxu0 %v84
    %97 = vmatprep.subr.bf16.mxu0 0
    %98 = vmatpush1.bf16.msra.mxu0 0
    %99 = vmatprep.subr.bf16.mxu0 0
    %100 = vmatpush1.bf16.msra.mxu0 0
    %101 = vmatprep.subr.bf16.mxu0 0
    %102 = vmatpush1.bf16.msra.mxu0 0
    %103 = vmatprep.subr.bf16.mxu0 0
    %104 = vmatpush1.bf16.msra.mxu0 0
    %105 = vmatprep.subr.bf16.mxu0 0
    %106 = vmatpush1.bf16.msra.mxu0 0
    %107 = vmatprep.subr.bf16.mxu0 0
    %108 = vmatpush1.bf16.msra.mxu0 0
    %109 = vmatprep.subr.bf16.mxu0 0
    %110 = vmatpush1.bf16.msra.mxu0 0
    %111 = vmatprep.subr.bf16.mxu0 0
    %112 = vmatpush1.bf16.msra.mxu0 0
    %113 = vmatprep.subr.bf16.mxu0 0
    %114 = vmatpush1.bf16.msra.mxu0 0
    %115 = vmatprep.subr.bf16.mxu0 0
    %116 = vmatpush1.bf16.msra.mxu0 0
    %117 = vmatprep.subr.bf16.mxu0 0
    %118 = vmatpush1.bf16.msra.mxu0 0
    %119 = vmatprep.subr.bf16.mxu0 0
    %120 = vmatpush1.bf16.msra.mxu0 0
    %121 = vmatprep.subr.bf16.mxu0 0
    %122 = vmatpush1.bf16.msra.mxu0 0
    %123 = vmatprep.subr.bf16.mxu0 0
    %124 = vmatpush1.bf16.msra.mxu0 0
    %125 = vmatprep.subr.bf16.mxu0 0
    %126 = vmatpush1.bf16.msra.mxu0 0
    %127 = vmatprep.mubr.bf16.mxu0 0
    %128 = vmatmul.mubr.bf16.gmra.mrb[0].mxu0 %v74
    %v129 = vpop.f32.mrb[0].mxu0
    %v130 = vadd.f32 %v35, %v129
    %v131 = vpop.f32.mrb[0].mxu0
    %v132 = vadd.f32 %v35, %v131
    %v133 = vpop.f32.mrb[0].mxu0
    %v134 = vadd.f32 %v40, %v133
    %v135 = vpop.f32.mrb[0].mxu0
    %v136 = vadd.f32 %v40, %v135
    %137 = vmatprep.mubr.bf16.mxu0 0
    %138 = vmatmul.mubr.bf16.gmra.mrb[0].mxu0 %v77
    %v139 = vpop.f32.mrb[0].mxu0
    %v140 = vadd.f32 %v45, %v139
    %v141 = vpop.f32.mrb[0].mxu0
    %v142 = vadd.f32 %v45, %v141
    %v143 = vpop.f32.mrb[0].mxu0
    %v144 = vadd.f32 %v50, %v143
    %v145 = vpop.f32.mrb[0].mxu0
    %v146 = vadd.f32 %v50, %v145
    %147 = vdwg.mxu0
    %148 = vmatprep.subr.bf16.mxu0 %v93
    %149 = vmatpush1.bf16.msra.mxu0 %v90
    %150 = vmatprep.subr.bf16.mxu0 0
    %151 = vmatpush1.bf16.msra.mxu0 0
    %152 = vmatprep.subr.bf16.mxu0 0
    %153 = vmatpush1.bf16.msra.mxu0 0
    %154 = vmatprep.subr.bf16.mxu0 0
    %155 = vmatpush1.bf16.msra.mxu0 0
    %156 = vmatprep.subr.bf16.mxu0 0
    %157 = vmatpush1.bf16.msra.mxu0 0
    %158 = vmatprep.subr.bf16.mxu0 0
    %159 = vmatpush1.bf16.msra.mxu0 0
    %160 = vmatprep.subr.bf16.mxu0 0
    %161 = vmatpush1.bf16.msra.mxu0 0
    %162 = vmatprep.subr.bf16.mxu0 0
    %163 = vmatpush1.bf16.msra.mxu0 0
    %164 = vmatprep.subr.bf16.mxu0 0
    %165 = vmatpush1.bf16.msra.mxu0 0
    %166 = vmatprep.subr.bf16.mxu0 0
    %167 = vmatpush1.bf16.msra.mxu0 0
    %168 = vmatprep.subr.bf16.mxu0 0
    %169 = vmatpush1.bf16.msra.mxu0 0
    %170 = vmatprep.subr.bf16.mxu0 0
    %171 = vmatpush1.bf16.msra.mxu0 0
    %172 = vmatprep.subr.bf16.mxu0 0
    %173 = vmatpush1.bf16.msra.mxu0 0
    %174 = vmatprep.subr.bf16.mxu0 0
    %175 = vmatpush1.bf16.msra.mxu0 0
    %176 = vmatprep.subr.bf16.mxu0 0
    %177 = vmatpush1.bf16.msra.mxu0 0
    %178 = vmatprep.subr.bf16.mxu0 0
    %179 = vmatpush1.bf16.msra.mxu0 0
    %180 = vmatprep.mubr.bf16.mxu0 0
    %181 = vmatmul.mubr.bf16.gmra.mrb[0].mxu0 %v74
    %v182 = vpop.f32.mrb[0].mxu0
    %v183 = vadd.f32 %v35, %v182
    %v184 = vpop.f32.mrb[0].mxu0
    %v185 = vadd.f32 %v35, %v184
    %v186 = vpop.f32.mrb[0].mxu0
    %v187 = vadd.f32 %v40, %v186
    %v188 = vpop.f32.mrb[0].mxu0
    %v189 = vadd.f32 %v40, %v188
    %190 = vmatprep.mubr.bf16.mxu0 0
    %191 = vmatmul.mubr.bf16.gmra.mrb[0].mxu0 %v77
    %v192 = vpop.f32.mrb[0].mxu0
    %v193 = vadd.f32 %v45, %v192
    %v194 = vpop.f32.mrb[0].mxu0
    %v195 = vadd.f32 %v45, %v194
    %v196 = vpop.f32.mrb[0].mxu0
    %v197 = vadd.f32 %v50, %v196
    %v198 = vpop.f32.mrb[0].mxu0
    %v199 = vadd.f32 %v50, %v198
    %200 = vdwg.mxu0
    %v201 = vmax.f32 %v130, 0.0
    %v202 = vmax.f32 %v132, 0.0
    %v203 = vmax.f32 %v183, 0.0
    %v204 = vmax.f32 %v185, 0.0
    %v205 = vmax.f32 %v134, 0.0
    %v206 = vmax.f32 %v136, 0.0
    %v207 = vmax.f32 %v187, 0.0
    %v208 = vmax.f32 %v189, 0.0
    %v209 = vmax.f32 %v140, 0.0
    %v210 = vmax.f32 %v142, 0.0
    %v211 = vmax.f32 %v193, 0.0
    %v212 = vmax.f32 %v195, 0.0
    %v213 = vmax.f32 %v144, 0.0
    %v214 = vmax.f32 %v146, 0.0
    %v215 = vmax.f32 %v197, 0.0
    %v216 = vmax.f32 %v199, 0.0
    %v217 = vld [vmem:[%s3] sm:$0xf]
    %v218 = vld [vmem:[%s3 + $0x4] sm:$0xf]
    %v219 = vpack.c.bf16 %v205, %v201
    %v220 = vpack.c.bf16 %v206, %v202
    %v221 = vpack.c.bf16 %v207, %v203
    %v222 = vpack.c.bf16 %v208, %v204
    %v223 = vpack.c.bf16 %v213, %v209
    %v224 = vpack.c.bf16 %v214, %v210
    %v225 = vpack.c.bf16 %v215, %v211
    %v226 = vpack.c.bf16 %v216, %v212
    %v227 = vld [vmem:[%s4] sm:$0xff]
    %v228 = vld [vmem:[%s4 + $0x8] sm:$0xff]
    %230 = vset.pattern.permute.xlu0 0
    %231 = vperm.xlu0 %230, %v227
    %v232 = vpop.permute.xlu0 %231
    %235 = vset.pattern.permute.xlu0 0
    %236 = vperm.xlu0 %235, %v228
    %v237 = vpop.permute.xlu0 %236
    %v241 = vunpack.c.l.b16 %v217
    %v242 = vunpack.c.l.b16 %v218
    %v243 = vpack.c.b16 %v242, %v241
    %vm244 = vcmask 261120
    %v246 = vsel %vm244, %v243, 0
    %248 = vmatprep.subr.bf16.mxu0 %v220
    %249 = vmatpush1.bf16.msra.mxu0 %v219
    %250 = vmatprep.subr.bf16.mxu0 %v224
    %251 = vmatpush1.bf16.msra.mxu0 %v223
    %252 = vmatprep.subr.bf16.mxu0 0
    %253 = vmatpush1.bf16.msra.mxu0 0
    %254 = vmatprep.subr.bf16.mxu0 0
    %255 = vmatpush1.bf16.msra.mxu0 0
    %256 = vmatprep.subr.bf16.mxu0 0
    %257 = vmatpush1.bf16.msra.mxu0 0
    %258 = vmatprep.subr.bf16.mxu0 0
    %259 = vmatpush1.bf16.msra.mxu0 0
    %260 = vmatprep.subr.bf16.mxu0 0
    %261 = vmatpush1.bf16.msra.mxu0 0
    %262 = vmatprep.subr.bf16.mxu0 0
    %263 = vmatpush1.bf16.msra.mxu0 0
    %264 = vmatprep.subr.bf16.mxu0 0
    %265 = vmatpush1.bf16.msra.mxu0 0
    %266 = vmatprep.subr.bf16.mxu0 0
    %267 = vmatpush1.bf16.msra.mxu0 0
    %268 = vmatprep.subr.bf16.mxu0 0
    %269 = vmatpush1.bf16.msra.mxu0 0
    %270 = vmatprep.subr.bf16.mxu0 0
    %271 = vmatpush1.bf16.msra.mxu0 0
    %272 = vmatprep.subr.bf16.mxu0 0
    %273 = vmatpush1.bf16.msra.mxu0 0
    %274 = vmatprep.subr.bf16.mxu0 0
    %275 = vmatpush1.bf16.msra.mxu0 0
    %276 = vmatprep.subr.bf16.mxu0 0
    %277 = vmatpush1.bf16.msra.mxu0 0
    %278 = vmatprep.subr.bf16.mxu0 0
    %279 = vmatpush1.bf16.msra.mxu0 0
    %280 = vmatprep.mubr.bf16.mxu0 0
    %281 = vmatmul.mubr.bf16.gmra.mrb[0].mxu0 %v246
    %v282 = vpop.f32.mrb[0].mxu0
    %v283 = vadd.f32 %v232, %v282
    %v284 = vpop.f32.mrb[0].mxu0
    %v285 = vadd.f32 %v232, %v284
    %v286 = vpop.f32.mrb[0].mxu0
    %v287 = vadd.f32 %v237, %v286
    %v288 = vpop.f32.mrb[0].mxu0
    %v289 = vadd.f32 %v237, %v288
    %290 = vdwg.mxu0
    %291 = vmatprep.subr.bf16.mxu0 %v222
    %292 = vmatpush1.bf16.msra.mxu0 %v221
    %293 = vmatprep.subr.bf16.mxu0 %v226
    %294 = vmatpush1.bf16.msra.mxu0 %v225
    %295 = vmatprep.subr.bf16.mxu0 0
    %296 = vmatpush1.bf16.msra.mxu0 0
    %297 = vmatprep.subr.bf16.mxu0 0
    %298 = vmatpush1.bf16.msra.mxu0 0
    %299 = vmatprep.subr.bf16.mxu0 0
    %300 = vmatpush1.bf16.msra.mxu0 0
    %301 = vmatprep.subr.bf16.mxu0 0
    %302 = vmatpush1.bf16.msra.mxu0 0
    %303 = vmatprep.subr.bf16.mxu0 0
    %304 = vmatpush1.bf16.msra.mxu0 0
    %305 = vmatprep.subr.bf16.mxu0 0
    %306 = vmatpush1.bf16.msra.mxu0 0
    %307 = vmatprep.subr.bf16.mxu0 0
    %308 = vmatpush1.bf16.msra.mxu0 0
    %309 = vmatprep.subr.bf16.mxu0 0
    %310 = vmatpush1.bf16.msra.mxu0 0
    %311 = vmatprep.subr.bf16.mxu0 0
    %312 = vmatpush1.bf16.msra.mxu0 0
    %313 = vmatprep.subr.bf16.mxu0 0
    %314 = vmatpush1.bf16.msra.mxu0 0
    %315 = vmatprep.subr.bf16.mxu0 0
    %316 = vmatpush1.bf16.msra.mxu0 0
    %317 = vmatprep.subr.bf16.mxu0 0
    %318 = vmatpush1.bf16.msra.mxu0 0
    %319 = vmatprep.subr.bf16.mxu0 0
    %320 = vmatpush1.bf16.msra.mxu0 0
    %321 = vmatprep.subr.bf16.mxu0 0
    %322 = vmatpush1.bf16.msra.mxu0 0
    %323 = vmatprep.mubr.bf16.mxu0 0
    %324 = vmatmul.mubr.bf16.gmra.mrb[0].mxu0 %v246
    %v325 = vpop.f32.mrb[0].mxu0
    %v326 = vadd.f32 %v232, %v325
    %v327 = vpop.f32.mrb[0].mxu0
    %v328 = vadd.f32 %v232, %v327
    %v329 = vpop.f32.mrb[0].mxu0
    %v330 = vadd.f32 %v237, %v329
    %v331 = vpop.f32.mrb[0].mxu0
    %v332 = vadd.f32 %v237, %v331
    %333 = vdwg.mxu0
    %334 = vst [vmem:[#allocation2] sm:$0xff] %v283
    %335 = vst [vmem:[#allocation2 + $0x8] sm:$0xff] %v285
    %336 = vst [vmem:[#allocation2 + $0x10] sm:$0xff] %v326
    %337 = vst [vmem:[#allocation2 + $0x18] sm:$0xff] %v328
    %338 = vst [vmem:[#allocation2 + $0x20] sm:$0xff] %v287
    %339 = vst [vmem:[#allocation2 + $0x28] sm:$0xff] %v289
    %340 = vst [vmem:[#allocation2 + $0x30] sm:$0xff] %v330
    %341 = vst [vmem:[#allocation2 + $0x38] sm:$0xff] %v332
    // Predicated region
    $region22: #{tpu_custom_call.1} parent=1 // pred_check
      _
    $region23: #{tpu_custom_call.1} parent=1 // pred_check_branch
      %343 = sbr.rel (0) target = $region25
    $region24: #{tpu_custom_call.1} parent=1 // pred_region
      %s345 = ssub.s32 1024, 1024
      %346 = vsyncadd [#allocation3], %s345
      %s347 = sshll.u32 [#allocation2], 4
      %s348 = int_to_ptr.vmem [resolvable:$true] %s347
      %353 = dma.vmem_to_hbm [thread:$0]  %s348, 1024, %s5, [#allocation3], 512, 512, 32
    $region25: #{tpu_custom_call.1} parent=1 // pred_fallthru
      _
    // Predicated region
    $region26: #{tpu_custom_call.1} parent=1 // pred_check
      _
    $region27: #{tpu_custom_call.1} parent=1 // pred_check_branch
      %355 = sbr.rel (0) target = $region29
    $region28: #{tpu_custom_call.1} parent=1 // pred_region
      %356 = dma.done [#allocation3], 1024
    $region29: #{tpu_custom_call.1} parent=1 // pred_fallthru
      _
    %357 = vsyncpa [#allocation3], 1

</llo_original>
